<compile_context>
chip_gen: v5e
topology: v5e:2x2
jax: 0.10.0
libtpu: 0.0.40
codegen_flags: <defaults>
</compile_context>

<pallas_src>
import math
import functools

import jax
import jax.numpy as jnp
from jax import lax
from jax.experimental import pallas as pl
from jax.experimental.pallas import tpu as pltpu


# ---------------------------------------------------------------------------
# VMEM budgeting helpers
# ---------------------------------------------------------------------------
def _padded_bytes(shape, dtype):
    """VMEM footprint of one buffer with last two dims padded to (8, 128)."""
    s = list(shape)
    if len(s) >= 1:
        s[-1] = pl.cdiv(s[-1], 128) * 128
    if len(s) >= 2:
        s[-2] = pl.cdiv(s[-2], 8) * 8
    n = 1
    for d in s:
        n *= int(d)
    return n * jnp.dtype(dtype).itemsize


def _vmem_limit(buffers):
    """buffers: iterable of (shape, dtype, buffer_count). Returns a byte limit."""
    total = sum(_padded_bytes(s, d) * c for s, d, c in buffers)
    total = int(total * 1.25) + (2 << 20)          # slack for compiler scratch
    return int(min(max(total, 8 << 20), 128 << 20))


# ---------------------------------------------------------------------------
# Fused QKV projection:  [q|k|v] = x @ [Wq'|Wk|Wv] + [bq'|bk|bv]
# (Wq', bq' already carry the 1/sqrt(dh) softmax scale.)
# ---------------------------------------------------------------------------
def _qkv_proj_kernel(x_ref, w_ref, b_ref, q_ref, k_ref, v_ref, *, d_model):
    x = x_ref[...].astype(w_ref.dtype)              # cast activation once
    y = jnp.dot(x, w_ref[...], preferred_element_type=jnp.float32) + b_ref[...]
    q_ref[...] = y[:, :d_model].astype(q_ref.dtype)
    k_ref[...] = y[:, d_model:2 * d_model].astype(k_ref.dtype)
    v_ref[...] = y[:, 2 * d_model:].astype(v_ref.dtype)


def fused_qkv_projection(x, w_qkv_t, b_qkv, *, out_dtype, tm=256):
    """x: (N, D) -> q, k, v each (N, D) in out_dtype. w_qkv_t: (D, 3D)."""
    N, D = x.shape
    tm = min(tm, N)
    cparams = pltpu.CompilerParams(
        dimension_semantics=("parallel",),
        vmem_limit_bytes=_vmem_limit([
            ((tm, D), x.dtype, 2),
            ((D, 3 * D), w_qkv_t.dtype, 2),
            ((1, 3 * D), jnp.float32, 2),
            ((tm, D), out_dtype, 6),
        ]))
    return pl.pallas_call(
        functools.partial(_qkv_proj_kernel, d_model=D),
        out_shape=[jax.ShapeDtypeStruct((N, D), out_dtype)] * 3,
        grid=(pl.cdiv(N, tm),),
        in_specs=[
            pl.BlockSpec((tm, D), lambda i: (i, 0)),
            pl.BlockSpec((D, 3 * D), lambda i: (0, 0)),     # resident weight
            pl.BlockSpec((1, 3 * D), lambda i: (0, 0)),
        ],
        out_specs=[pl.BlockSpec((tm, D), lambda i: (i, 0))] * 3,
        compiler_params=cparams,
    )(x, w_qkv_t, b_qkv)


# ---------------------------------------------------------------------------
# Row- and column-tiled linear:  y = x @ W_t + b   (cross-attention projections)
# ---------------------------------------------------------------------------
def _linear_kernel(x_ref, w_ref, b_ref, o_ref):
    x = x_ref[...].astype(w_ref.dtype)
    y = jnp.dot(x, w_ref[...], preferred_element_type=jnp.float32) + b_ref[...]
    o_ref[...] = y.astype(o_ref.dtype)


def linear(x, w_t, b_row, *, out_dtype, tm=256, tn=512):
    """x: (N, Din), w_t: (Din, Dout), b_row: (1, Dout) f32 -> (N, Dout)."""
    N, Din = x.shape
    Dout = w_t.shape[1]
    tm = min(tm, N)
    tn = min(tn, Dout)
    cparams = pltpu.CompilerParams(
        dimension_semantics=("parallel", "parallel"),
        vmem_limit_bytes=_vmem_limit([
            ((tm, Din), x.dtype, 2),
            ((Din, tn), w_t.dtype, 2),
            ((1, tn), jnp.float32, 2),
            ((tm, tn), out_dtype, 2),
        ]))
    return pl.pallas_call(
        _linear_kernel,
        out_shape=jax.ShapeDtypeStruct((N, Dout), out_dtype),
        grid=(pl.cdiv(N, tm), pl.cdiv(Dout, tn)),
        in_specs=[
            pl.BlockSpec((tm, Din), lambda i, j: (i, 0)),
            pl.BlockSpec((Din, tn), lambda i, j: (0, j)),
            pl.BlockSpec((1, tn), lambda i, j: (0, j)),
        ],
        out_specs=pl.BlockSpec((tm, tn), lambda i, j: (i, j)),
        compiler_params=cparams,
    )(x, w_t, b_row)


# ---------------------------------------------------------------------------
# Flash attention with fused output projection.
#   grid = (B, q_tiles, kv_tiles).  q/out blocks are (tq, D) and stay resident
#   across the innermost 'arbitrary' kv axis.  Heads are static column slices
#   of the (tq, D) slabs.  Online-softmax state: m/l (tq, H), acc (tq, D).
# ---------------------------------------------------------------------------
def _flash_mha_kernel(*refs, num_heads, dh, mask_kind, sk_total, tk, approx_recip):
    if mask_kind == "none":
        q_ref, k_ref, v_ref, wo_ref, bo_ref, o_ref, m_scr, l_scr, acc_scr = refs
        mask_ref = None
    else:
        (q_ref, k_ref, v_ref, mask_ref, wo_ref, bo_ref, o_ref,
         m_scr, l_scr, acc_scr) = refs

    j = pl.program_id(2)
    mm_dtype = wo_ref.dtype                       # compute dtype (f32 or bf16)

    @pl.when(j == 0)
    def _init():
        m_scr[...] = jnp.full(m_scr.shape, -jnp.inf, jnp.float32)
        l_scr[...] = jnp.zeros(l_scr.shape, jnp.float32)
        acc_scr[...] = jnp.zeros(acc_scr.shape, jnp.float32)

    # Ragged-tail handling (static decision; no-op when Sk % tk == 0).
    needs_tail = (sk_total % tk) != 0
    if needs_tail:
        col_valid = (j * tk + lax.broadcasted_iota(jnp.int32, (1, tk), 1)) < sk_total
        row_valid = (j * tk + lax.broadcasted_iota(jnp.int32, (tk, 1), 0)) < sk_total

    if mask_kind == "key":
        key_keep = mask_ref[...] != 0             # (1, tk) key-padding mask

    for h in range(num_heads):                    # static unroll over heads
        lo, hi = h * dh, (h + 1) * dh
        q = q_ref[:, lo:hi].astype(mm_dtype)      # (tq, dh); 1/sqrt(dh) pre-folded
        k = k_ref[:, lo:hi].astype(mm_dtype)      # (tk, dh)
        v = v_ref[:, lo:hi]                       # (tk, dh)
        if needs_tail:
            v = jnp.where(row_valid, v, 0)        # padded V rows -> exact zeros
        v = v.astype(mm_dtype)

        # score = q @ k^T, contracting last dims (no explicit transpose).
        s = lax.dot_general(q, k, (((1,), (1,)), ((), ())),
                            preferred_element_type=jnp.float32)      # (tq, tk)

        if mask_kind == "key":
            s = jnp.where(key_keep, s, -1e9)      # PyTorch masked_fill semantics
        elif mask_kind == "full":
            s = jnp.where(mask_ref[h] != 0, s, -1e9)
        if needs_tail:
            s = jnp.where(col_valid, s, -jnp.inf)  # padded keys contribute 0

        # Online softmax (all elementwise math f32).
        m_prev = m_scr[:, h:h + 1]                                   # (tq, 1)
        m_new = jnp.maximum(m_prev, jnp.max(s, axis=-1, keepdims=True))
        alpha = jnp.exp(m_prev - m_new)
        p = jnp.exp(s - m_new)                                       # (tq, tk)
        l_scr[:, h:h + 1] = alpha * l_scr[:, h:h + 1] + jnp.sum(p, -1, keepdims=True)
        acc_scr[:, lo:hi] = alpha * acc_scr[:, lo:hi] + jnp.dot(
            p.astype(mm_dtype), v, preferred_element_type=jnp.float32)
        m_scr[:, h:h + 1] = m_new

    @pl.when(j == pl.num_programs(2) - 1)
    def _finalize():
        inv_l = pl.reciprocal(l_scr[...], approx=approx_recip)       # (tq, H)
        for h in range(num_heads):
            lo, hi = h * dh, (h + 1) * dh
            acc_scr[:, lo:hi] = acc_scr[:, lo:hi] * inv_l[:, h:h + 1]
        attn = acc_scr[...].astype(mm_dtype)                         # (tq, D)
        out = jnp.dot(attn, wo_ref[...],
                      preferred_element_type=jnp.float32) + bo_ref[...]
        o_ref[...] = out.astype(o_ref.dtype)      # single lane-dense store


def flash_mha(q, k, v, wo_t, bo_row, mask_spec, *, num_heads, out_dtype,
              approx_recip, q_tile=128, kv_tile=256):
    """q: (B, Sq, D), k/v: (B, Sk, D); returns attention @ Wo + bo, (B, Sq, D)."""
    B, Sq, D = q.shape
    Sk = k.shape[1]
    dh = D // num_heads
    tq = min(q_tile, Sq)
    tk = min(kv_tile, Sk)
    n_q = pl.cdiv(Sq, tq)
    n_kv = pl.cdiv(Sk, tk)

    mask_kind, mask_arr = mask_spec
    kern = functools.partial(
        _flash_mha_kernel, num_heads=num_heads, dh=dh, mask_kind=mask_kind,
        sk_total=Sk, tk=tk, approx_recip=approx_recip)

    in_specs = [
        pl.BlockSpec((pl.Squeezed(), tq, D), lambda b, i, j: (b, i, 0)),   # q
        pl.BlockSpec((pl.Squeezed(), tk, D), lambda b, i, j: (b, j, 0)),   # k
        pl.BlockSpec((pl.Squeezed(), tk, D), lambda b, i, j: (b, j, 0)),   # v
    ]
    args = [q, k, v]
    vmem = [((tq, D), q.dtype, 2), ((tk, D), k.dtype, 2), ((tk, D), v.dtype, 2),
            ((tq, D), out_dtype, 2),
            ((D, D), wo_t.dtype, 2), ((1, D), jnp.float32, 2),
            ((tq, num_heads), jnp.float32, 2), ((tq, D), jnp.float32, 1)]

    if mask_kind == "key":      # compact (B, 1, Sk) int8 key-padding mask
        in_specs.append(pl.BlockSpec((pl.Squeezed(), 1, tk),
                                     lambda b, i, j: (b, 0, j)))
        args.append(mask_arr)
        vmem.append(((1, tk), jnp.int8, 2))
    elif mask_kind == "full":   # general (B, H, Sq, Sk) int8 mask (fallback)
        in_specs.append(pl.BlockSpec((pl.Squeezed(), num_heads, tq, tk),
                                     lambda b, i, j: (b, 0, i, j)))
        args.append(mask_arr)
        vmem.append(((num_heads, tq, tk), jnp.int8, 2))

    in_specs += [
        pl.BlockSpec((D, D), lambda b, i, j: (0, 0)),   # Wo resident
        pl.BlockSpec((1, D), lambda b, i, j: (0, 0)),   # bo
    ]
    args += [wo_t, bo_row]

    cparams = pltpu.CompilerParams(
        dimension_semantics=("parallel", "parallel", "arbitrary"),
        vmem_limit_bytes=_vmem_limit(vmem))

    return pl.pallas_call(
        kern,
        out_shape=jax.ShapeDtypeStruct((B, Sq, D), out_dtype),
        grid=(B, n_q, n_kv),
        in_specs=in_specs,
        out_specs=pl.BlockSpec((pl.Squeezed(), tq, D), lambda b, i, j: (b, i, 0)),
        scratch_shapes=[
            pltpu.VMEM((tq, num_heads), jnp.float32),   # running max m (lane-packed)
            pltpu.VMEM((tq, num_heads), jnp.float32),   # running sum l (lane-packed)
            pltpu.VMEM((tq, D), jnp.float32),           # accumulator slab
        ],
        compiler_params=cparams,
    )(*args)


# ---------------------------------------------------------------------------
# Parameter preparation + full forward
# ---------------------------------------------------------------------------
def prepare_params(raw, num_heads, compute_dtype=jnp.bfloat16):
    """Turn raw f32 (PyTorch-style, pre-transposed) weights into kernel params.

    Folds 1/sqrt(dh) into Wq/bq, pre-concatenates [Wq|Wk|Wv] + bias, and stores
    matmul operands in `compute_dtype` (None -> exact f32 path)."""
    D = raw["wq_t"].shape[0]
    assert D % num_heads == 0
    dh = D // num_heads
    scale = 1.0 / math.sqrt(dh)
    wdt = compute_dtype if compute_dtype is not None else raw["wq_t"].dtype

    wq = (raw["wq_t"] * scale).astype(wdt)
    wk = raw["wk_t"].astype(wdt)
    wv = raw["wv_t"].astype(wdt)
    bq = raw["bq"] * scale
    return {
        "num_heads": num_heads,
        "compute_dtype": compute_dtype,
        "d_model": D,
        "w_qkv_t": jnp.concatenate([wq, wk, wv], axis=1),                 # (D, 3D)
        "b_qkv": jnp.concatenate([bq, raw["bk"], raw["bv"]])
                    .reshape(1, 3 * D).astype(jnp.float32),
        "wq_t": wq, "bq": bq.reshape(1, D).astype(jnp.float32),
        "wk_t": wk, "bk": raw["bk"].reshape(1, D).astype(jnp.float32),
        "wv_t": wv, "bv": raw["bv"].reshape(1, D).astype(jnp.float32),
        "wo_t": raw["wo_t"].astype(wdt),
        "bo": raw["bo"].reshape(1, D).astype(jnp.float32),
    }


def multi_head_attention_block(kparams, query, key, value, mask=None, *,
                               q_tile=128, kv_tile=256):
    """query: (B, Sq, D); key/value: (B, Sk, D);
    mask: None or anything broadcastable to (B, H, Sq, Sk)."""
    num_heads = kparams["num_heads"]
    compute_dtype = kparams["compute_dtype"]
    D = kparams["d_model"]
    B, Sq, _ = query.shape
    Sk = key.shape[1]
    act_dtype = compute_dtype if compute_dtype is not None else query.dtype

    if (query is key) and (key is value):
        # Self-attention fast path (Python identity check; equal-but-distinct
        # arrays take the cross path below — slower, numerically identical).
        q2, k2, v2 = fused_qkv_projection(
            query.reshape(B * Sq, D), kparams["w_qkv_t"], kparams["b_qkv"],
            out_dtype=act_dtype)
        q = q2.reshape(B, Sq, D)
        k = k2.reshape(B, Sq, D)
        v = v2.reshape(B, Sq, D)
    else:
        q = linear(query.reshape(B * Sq, D), kparams["wq_t"], kparams["bq"],
                   out_dtype=act_dtype).reshape(B, Sq, D)
        k = linear(key.reshape(B * Sk, D), kparams["wk_t"], kparams["bk"],
                   out_dtype=act_dtype).reshape(B, Sk, D)
        v = linear(value.reshape(B * Sk, D), kparams["wv_t"], kparams["bv"],
                   out_dtype=act_dtype).reshape(B, Sk, D)

    if mask is None:
        mask_spec = ("none", None)
    else:
        m = jnp.asarray(mask)
        assert m.ndim <= 4, "mask must be broadcastable to (B, H, Sq, Sk)"
        m4 = m.reshape((1,) * (4 - m.ndim) + m.shape)
        if m4.shape[1] == 1 and m4.shape[2] == 1:
            # Key-padding mask: ship compactly as (B, 1, Sk) int8.
            keep = jnp.broadcast_to(m4[:, 0, 0, :] != 0, (B, Sk))
            mask_spec = ("key", keep.astype(jnp.int8).reshape(B, 1, Sk))
        else:
            # TODO(synk): head/query-dependent masks still ship the full
            # (B,H,Sq,Sk) int8 tensor; structured masks (e.g. causal) could be
            # generated in-kernel from iota instead.
            keep = jnp.broadcast_to(m4 != 0, (B, num_heads, Sq, Sk))
            mask_spec = ("full", keep.astype(jnp.int8))

    return flash_mha(q, k, v, kparams["wo_t"], kparams["bo"], mask_spec,
                     num_heads=num_heads, out_dtype=query.dtype,
                     approx_recip=(compute_dtype is not None),
                     q_tile=q_tile, kv_tile=kv_tile)


# ---------------------------------------------------------------------------
# Pure-JAX reference (mirrors the PyTorch module exactly, f32).
# ---------------------------------------------------------------------------
def reference_forward(raw, query, key, value, mask=None, *, num_heads):
    B, Sq, D = query.shape
    Dh = D // num_heads
    q = query @ raw["wq_t"] + raw["bq"]
    k = key @ raw["wk_t"] + raw["bk"]
    v = value @ raw["wv_t"] + raw["bv"]

    def sh(x):
        return x.reshape(B, -1, num_heads, Dh).transpose(0, 2, 1, 3)

    q, k, v = sh(q), sh(k), sh(v)
    score = jnp.einsum("bhqd,bhkd->bhqk", q, k) / math.sqrt(Dh)
    if mask is not None:
        score = jnp.where(mask == 0, -1e9, score)
    p = jax.nn.softmax(score, axis=-1)
    o = jnp.einsum("bhqk,bhkd->bhqd", p, v)
    o = o.transpose(0, 2, 1, 3).reshape(B, Sq, D)
    return o @ raw["wo_t"] + raw["bo"]


if __name__ == "__main__":
    B, Sq, d_model, num_heads = 2, 8, 32, 4

    key0 = jax.random.PRNGKey(0)
    keys = jax.random.split(key0, 14)
    scale = 1.0 / math.sqrt(d_model)

    # Weights stored pre-transposed (in, out) so kernels compute x @ W_t + b,
    # matching PyTorch's y = x @ W.T + b.
    raw_params = {
        "wq_t": jax.random.uniform(keys[0], (d_model, d_model), jnp.float32, -scale, scale),
        "bq":   jax.random.uniform(keys[1], (d_model,), jnp.float32, -scale, scale),
        "wk_t": jax.random.uniform(keys[2], (d_model, d_model), jnp.float32, -scale, scale),
        "bk":   jax.random.uniform(keys[3], (d_model,), jnp.float32, -scale, scale),
        "wv_t": jax.random.uniform(keys[4], (d_model, d_model), jnp.float32, -scale, scale),
        "bv":   jax.random.uniform(keys[5], (d_model,), jnp.float32, -scale, scale),
        "wo_t": jax.random.uniform(keys[6], (d_model, d_model), jnp.float32, -scale, scale),
        "bo":   jax.random.uniform(keys[7], (d_model,), jnp.float32, -scale, scale),
    }

    params_f32 = prepare_params(raw_params, num_heads, compute_dtype=None)   # exact path
    params_bf16 = prepare_params(raw_params, num_heads)                      # bf16 default

    # ---- Test 1: self-attention, no mask (fused QKV, no mask operand), f32 ----
    x = jax.random.normal(keys[8], (B, Sq, d_model), jnp.float32)
    out1 = jax.block_until_ready(multi_head_attention_block(params_f32, x, x, x))
    ref1 = reference_forward(raw_params, x, x, x, num_heads=num_heads)
    assert out1.shape == (B, Sq, d_model)
    assert jnp.allclose(out1, ref1, rtol=5e-3, atol=5e-3), "self-attn mismatch"

    # ---- Test 2: cross-attention, compact key-padding mask, ragged kv tail ----
    Sk = 160                     # kv_tile=128 -> 2 kv tiles, 32-wide masked tail
    query = jax.random.normal(keys[9], (B, Sq, d_model), jnp.float32)
    key_ = jax.random.normal(keys[10], (B, Sk, d_model), jnp.float32)
    value = jax.random.normal(keys[11], (B, Sk, d_model), jnp.float32)
    mask = jnp.ones((B, 1, 1, Sk), jnp.int32).at[:, :, :, Sk - 5:].set(0)
    out2 = jax.block_until_ready(
        multi_head_attention_block(params_f32, query, key_, value, mask=mask,
                                   kv_tile=128))
    ref2 = reference_forward(raw_params, query, key_, value, mask=mask,
                             num_heads=num_heads)
    assert out2.shape == (B, Sq, d_model)
    assert jnp.allclose(out2, ref2, rtol=5e-3, atol=5e-3), "cross-attn mismatch"

    # ---- Test 3: self-attention with causal mask (full-mask fallback), f32 ----
    causal = jnp.tril(jnp.ones((Sq, Sq), jnp.int32)).reshape(1, 1, Sq, Sq)
    out3 = jax.block_until_ready(
        multi_head_attention_block(params_f32, x, x, x, mask=causal))
    ref3 = reference_forward(raw_params, x, x, x, mask=causal, num_heads=num_heads)
    assert jnp.allclose(out3, ref3, rtol=5e-3, atol=5e-3), "causal mismatch"

    # ---- Test 4: default bf16 compute path (looser tolerance) ----
    out4 = jax.block_until_ready(multi_head_attention_block(params_bf16, x, x, x))
    assert jnp.allclose(out4, ref1, rtol=5e-2, atol=5e-2), "bf16 path mismatch"

    print("KERNEL_OK")
</pallas_src>

<mosaic_0001>
module attributes {stable_mosaic.version = 11 : i64} {
  func.func @_qkv_proj_kernel(%arg0: i32, %arg1: memref<16x32xf32, #tpu.memory_space<vmem>>, %arg2: memref<32x96xf32, #tpu.memory_space<vmem>>, %arg3: memref<1x96xf32, #tpu.memory_space<vmem>>, %arg4: memref<16x32xf32, #tpu.memory_space<vmem>>, %arg5: memref<16x32xf32, #tpu.memory_space<vmem>>, %arg6: memref<16x32xf32, #tpu.memory_space<vmem>>) attributes {dimension_semantics = [#tpu.dimension_semantics<parallel>], iteration_bounds = array<i64: 1>, scalar_prefetch = 0 : i64, scratch_operands = 0 : i64, tpu.core_type = #tpu.core_type<tc>, window_params = [{transform_indices = @transform_0, window_bounds = array<i64: 16, 32>}, {pipeline_mode = #tpu.pipeline_mode<synchronous>, transform_indices = @transform_1, window_bounds = array<i64: 32, 96>}, {pipeline_mode = #tpu.pipeline_mode<synchronous>, transform_indices = @transform_2, window_bounds = array<i64: 1, 96>}, {transform_indices = @transform_3, window_bounds = array<i64: 16, 32>}, {transform_indices = @transform_4, window_bounds = array<i64: 16, 32>}, {transform_indices = @transform_5, window_bounds = array<i64: 16, 32>}]} {
    %c0 = arith.constant 0 : index
    %c0_0 = arith.constant 0 : index
    %0 = vector.load %arg1[%c0, %c0_0] : memref<16x32xf32, #tpu.memory_space<vmem>>, vector<16x32xf32>
    %c0_1 = arith.constant 0 : index
    %c0_2 = arith.constant 0 : index
    %1 = vector.load %arg2[%c0_1, %c0_2] : memref<32x96xf32, #tpu.memory_space<vmem>>, vector<32x96xf32>
    %cst = arith.constant dense<0.000000e+00> : vector<16x96xf32>
    %2 = tpu.matmul %0, %1, %cst {dimension_numbers = #tpu.dot_dimension_numbers<[1], [0], [0], [1], [0, 0, 1, 1], [], []>} : vector<16x32xf32>, vector<32x96xf32>, vector<16x96xf32> -> vector<16x96xf32>
    %c0_3 = arith.constant 0 : index
    %c0_4 = arith.constant 0 : index
    %3 = vector.load %arg3[%c0_3, %c0_4] : memref<1x96xf32, #tpu.memory_space<vmem>>, vector<1x96xf32>
    %4 = vector.broadcast %3 : vector<1x96xf32> to vector<16x96xf32>
    %5 = arith.addf %2, %4 : vector<16x96xf32>
    %6 = vector.extract_strided_slice %5 {offsets = [0, 0], sizes = [16, 32], strides = [1, 1]} : vector<16x96xf32> to vector<16x32xf32>
    %c0_5 = arith.constant 0 : index
    %c0_6 = arith.constant 0 : index
    %7 = vector.load %arg4[%c0_5, %c0_6] : memref<16x32xf32, #tpu.memory_space<vmem>>, vector<16x32xf32>
    tpu.vector_store %arg4[%c0_5, %c0_6], %6 {strides = array<i32>} : memref<16x32xf32, #tpu.memory_space<vmem>>, vector<16x32xf32>,
    %8 = vector.extract_strided_slice %5 {offsets = [0, 32], sizes = [16, 32], strides = [1, 1]} : vector<16x96xf32> to vector<16x32xf32>
    %c0_7 = arith.constant 0 : index
    %c0_8 = arith.constant 0 : index
    %9 = vector.load %arg5[%c0_7, %c0_8] : memref<16x32xf32, #tpu.memory_space<vmem>>, vector<16x32xf32>
    tpu.vector_store %arg5[%c0_7, %c0_8], %8 {strides = array<i32>} : memref<16x32xf32, #tpu.memory_space<vmem>>, vector<16x32xf32>,
    %10 = vector.extract_strided_slice %5 {offsets = [0, 64], sizes = [16, 32], strides = [1, 1]} : vector<16x96xf32> to vector<16x32xf32>
    %c0_9 = arith.constant 0 : index
    %c0_10 = arith.constant 0 : index
    %11 = vector.load %arg6[%c0_9, %c0_10] : memref<16x32xf32, #tpu.memory_space<vmem>>, vector<16x32xf32>
    tpu.vector_store %arg6[%c0_9, %c0_10], %10 {strides = array<i32>} : memref<16x32xf32, #tpu.memory_space<vmem>>, vector<16x32xf32>,
    return
  }
  func.func @transform_0(%arg0: i32) -> (i32, i32) {
    %c0_i32 = arith.constant 0 : i32
    %c0_i32_0 = arith.constant 0 : i32
    return %arg0, %c0_i32 : i32, i32
  }
  func.func @transform_1(%arg0: i32) -> (i32, i32) {
    %c0_i32 = arith.constant 0 : i32
    %c0_i32_0 = arith.constant 0 : i32
    %c0_i32_1 = arith.constant 0 : i32
    return %c0_i32, %c0_i32_0 : i32, i32
  }
  func.func @transform_2(%arg0: i32) -> (i32, i32) {
    %c0_i32 = arith.constant 0 : i32
    %c0_i32_0 = arith.constant 0 : i32
    %c0_i32_1 = arith.constant 0 : i32
    return %c0_i32, %c0_i32_0 : i32, i32
  }
  func.func @transform_3(%arg0: i32) -> (i32, i32) {
    %c0_i32 = arith.constant 0 : i32
    %c0_i32_0 = arith.constant 0 : i32
    return %arg0, %c0_i32 : i32, i32
  }
  func.func @transform_4(%arg0: i32) -> (i32, i32) {
    %c0_i32 = arith.constant 0 : i32
    %c0_i32_0 = arith.constant 0 : i32
    return %arg0, %c0_i32 : i32, i32
  }
  func.func @transform_5(%arg0: i32) -> (i32, i32) {
    %c0_i32 = arith.constant 0 : i32
    %c0_i32_0 = arith.constant 0 : i32
    return %arg0, %c0_i32 : i32, i32
  }
}

</mosaic_0001>

<llo_original>
// kernel: tpu_custom_call.1
$region0: #{tpu_custom_call.1}
  #allocation0 [shape = 'u32[]', space=smem, size = 0x4, offset = 0x4, fixed_abs, tag = 'smem constant byte address 0x4 - core index']
  #allocation1 [shape = 'u32[72,128]{1,0:T(1,128)}', space=vmem, size = 0x9000, scoped, tag = 'internal scratch']
  %s0 = inlined_call_operand.hbm [shape: f32[16,32], index: 0, kind: input, shape index: {}]
  %s1 = inlined_call_operand.hbm [shape: f32[32,96], index: 1, kind: input, shape index: {}]
  %s2 = inlined_call_operand.vmem [shape: f32[1,96], index: 2, kind: input, shape index: {}]
  %s3 = inlined_call_operand.hbm [shape: f32[16,32], index: 3, kind: output, shape index: {0}]
  %s4 = inlined_call_operand.hbm [shape: f32[16,32], index: 4, kind: output, shape index: {1}]
  %s5 = inlined_call_operand.hbm [shape: f32[16,32], index: 5, kind: output, shape index: {2}]
  %6 = xla_tuple %s3, %s4, %s5
  %s7 = sld [smem:[#allocation0]]
  $region46: #{tpu_custom_call.1} parent=0
    _
  %s9 = ssub.s32 1, %s7
  %s10 = scalar_select 0, %s9, %s7
  $region1: #{tpu_custom_call.1} parent=0
    #allocation2 [shape = 'u8[8192]{0}', space=vmem, size = 0x2000, scoped, tag = 'input window, operand 0, single buffered']
    #allocation3 [shape = 's32[1]{0}', space=sflag, size = 0x4, scoped, tag = 'scoped memory for tpu_custom_call.1']
    #allocation4 [shape = 's32[1]{0}', space=sflag, size = 0x4, scoped, tag = 'scoped memory for tpu_custom_call.1']
    #allocation5 [shape = 'u8[16384]{0}', space=vmem, size = 0x4000, scoped, tag = 'input window, operand 1, single buffered']
    #allocation6 [shape = 's32[1]{0}', space=sflag, size = 0x4, scoped, tag = 'scoped memory for tpu_custom_call.1']
    #allocation7 [shape = 'u8[8192]{0}', space=vmem, size = 0x2000, scoped, tag = 'output window, operand 0, single buffered']
    #allocation8 [shape = 'u8[8192]{0}', space=vmem, size = 0x2000, scoped, tag = 'output window, operand 1, single buffered']
    #allocation9 [shape = 's32[1]{0}', space=sflag, size = 0x4, scoped, tag = 'scoped memory for tpu_custom_call.1']
    #allocation10 [shape = 'u8[8192]{0}', space=vmem, size = 0x2000, scoped, tag = 'output window, operand 2, single buffered']
    %11 = vsyncpa [#allocation3], 0
    %12 = vsyncpa [#allocation6], 0
    %13 = vsyncpa [#allocation4], 0
    %14 = vsyncpa [#allocation9], 0
    // Predicated region
    $region2: #{tpu_custom_call.1} parent=1 // pred_check
      _
    $region3: #{tpu_custom_call.1} parent=1 // pred_check_branch
      %16 = sbr.rel (0) target = $region5
    $region4: #{tpu_custom_call.1} parent=1 // pred_region
      %18 = vsyncadd [#allocation3], 0
      %s19 = sshll.u32 %s0, 4
      %s20 = int_to_ptr.hbm [resolvable:$true] %s19
      %s21 = sshll.u32 [#allocation2], 4
      %s22 = int_to_ptr.vmem [resolvable:$true] %s21
      %27 = dma.hbm_to_vmem [thread:$0]  %s20, 256, %s22, [#allocation3], 128, 128, 8
    $region5: #{tpu_custom_call.1} parent=1 // pred_fallthru
      _
    // Predicated region
    $region6: #{tpu_custom_call.1} parent=1 // pred_check
      _
    $region7: #{tpu_custom_call.1} parent=1 // pred_check_branch
      %29 = sbr.rel (0) target = $region9
    $region8: #{tpu_custom_call.1} parent=1 // pred_region
      %31 = vsyncadd [#allocation6], 0
      %s32 = sshll.u32 %s1, 4
      %s33 = int_to_ptr.hbm [resolvable:$true] %s32
      %s34 = sshll.u32 [#allocation5], 4
      %s35 = int_to_ptr.vmem [resolvable:$true] %s34
      %40 = dma.hbm_to_vmem [thread:$0]  %s33, 512, %s35, [#allocation6], 128, 128, 8
    $region9: #{tpu_custom_call.1} parent=1 // pred_fallthru
      _
    // Predicated region
    $region10: #{tpu_custom_call.1} parent=1 // pred_check
      _
    $region11: #{tpu_custom_call.1} parent=1 // pred_check_branch
      %42 = sbr.rel (0) target = $region13
    $region12: #{tpu_custom_call.1} parent=1 // pred_region
      _
    $region13: #{tpu_custom_call.1} parent=1 // pred_fallthru
      _
    // Predicated region
    $region14: #{tpu_custom_call.1} parent=1 // pred_check
      _
    $region15: #{tpu_custom_call.1} parent=1 // pred_check_branch
      %44 = sbr.rel (0) target = $region17
    $region16: #{tpu_custom_call.1} parent=1 // pred_region
      %46 = dma.done [#allocation3], 256
    $region17: #{tpu_custom_call.1} parent=1 // pred_fallthru
      _
    // Predicated region
    $region18: #{tpu_custom_call.1} parent=1 // pred_check
      _
    $region19: #{tpu_custom_call.1} parent=1 // pred_check_branch
      %48 = sbr.rel (0) target = $region21
    $region20: #{tpu_custom_call.1} parent=1 // pred_region
      %50 = dma.done [#allocation6], 512
    $region21: #{tpu_custom_call.1} parent=1 // pred_fallthru
      _
    %v51 = vld [vmem:[#allocation2] sm:$0xff]
    %v52 = vld [vmem:[#allocation2 + $0x8] sm:$0xff]
    %v53 = vld [vmem:[#allocation5] sm:$0xff]
    %v54 = vld [vmem:[#allocation5 + $0x8] sm:$0xff]
    %v55 = vld [vmem:[#allocation5 + $0x10] sm:$0xff]
    %v56 = vld [vmem:[#allocation5 + $0x18] sm:$0xff]
    %v57 = vld [vmem:[%s2] sm:$0x1]
    %v59 = vperm.slane %v57, 0
    %vm61 = vcmask 261120
    %v63 = vsel %vm61, %v51, 0
    %v66 = vsel %vm61, %v52, 0
    %68 = vmatpush.msra.mxu0 0.0
    %69 = vmatpush.msra.mxu0 0.0
    %70 = vmatpush.msra.mxu0 0.0
    %71 = vmatpush.msra.mxu0 0.0
    %72 = vmatpush.msra.mxu0 0.0
    %73 = vmatpush.msra.mxu0 0.0
    %74 = vmatpush.msra.mxu0 0.0
    %75 = vmatpush.msra.mxu0 0.0
    %76 = vmatpush.msra.mxu0 0.0
    %77 = vmatpush.msra.mxu0 0.0
    %78 = vmatpush.msra.mxu0 0.0
    %79 = vmatpush.msra.mxu0 0.0
    %80 = vmatpush.msra.mxu0 %v56
    %81 = vmatpush.msra.mxu0 %v55
    %82 = vmatpush.msra.mxu0 %v54
    %83 = vmatpush.msra.mxu0 %v53
    %84 = vmatmul.f32.gmra.mxu0 %v63
    %v85 = vpop.f32.mrf.mxu0
    %v86 = vadd.f32 %v59, %v85
    %87 = vmatmul.f32.gmra.mxu0 %v66
    %v88 = vpop.f32.mrf.mxu0
    %v89 = vadd.f32 %v59, %v88
    %90 = vdwg.mxu0
    %91 = vst.msk [vmem:[#allocation7] sm:$0xff] %vm61, %v86
    %92 = vst.msk [vmem:[#allocation7 + $0x8] sm:$0xff] %vm61, %v89
    %95 = vrot.lane.b32.xlu0 %v86, 96
    %v96 = vpop.permute.xlu0 %95
    %97 = vrot.lane.b32.xlu0 %v89, 96
    %v98 = vpop.permute.xlu0 %97
    %101 = vst.msk [vmem:[#allocation8] sm:$0xff] %vm61, %v96
    %102 = vst.msk [vmem:[#allocation8 + $0x8] sm:$0xff] %vm61, %v98
    %103 = vrot.lane.b32.xlu0 %v86, 64
    %v104 = vpop.permute.xlu0 %103
    %105 = vrot.lane.b32.xlu0 %v89, 64
    %v106 = vpop.permute.xlu0 %105
    %109 = vst.msk [vmem:[#allocation10] sm:$0xff] %vm61, %v104
    %110 = vst.msk [vmem:[#allocation10 + $0x8] sm:$0xff] %vm61, %v106
    // Predicated region
    $region22: #{tpu_custom_call.1} parent=1 // pred_check
      _
    $region23: #{tpu_custom_call.1} parent=1 // pred_check_branch
      %112 = sbr.rel (0) target = $region25
    $region24: #{tpu_custom_call.1} parent=1 // pred_region
      %114 = vsyncadd [#allocation4], 0
      %s115 = sshll.u32 [#allocation7], 4
      %s116 = int_to_ptr.vmem [resolvable:$true] %s115
      %s117 = sshll.u32 %s3, 4
      %s118 = int_to_ptr.hbm [resolvable:$true] %s117
      %123 = dma.vmem_to_hbm [thread:$0]  %s116, 256, %s118, [#allocation4], 128, 128, 8
    $region25: #{tpu_custom_call.1} parent=1 // pred_fallthru
      _
    // Predicated region
    $region26: #{tpu_custom_call.1} parent=1 // pred_check
      _
    $region27: #{tpu_custom_call.1} parent=1 // pred_check_branch
      %125 = sbr.rel (0) target = $region29
    $region28: #{tpu_custom_call.1} parent=1 // pred_region
      %127 = vsyncadd [#allocation9], 0
      %s128 = sshll.u32 [#allocation8], 4
      %s129 = int_to_ptr.vmem [resolvable:$true] %s128
      %s130 = sshll.u32 %s4, 4
      %s131 = int_to_ptr.hbm [resolvable:$true] %s130
      %136 = dma.vmem_to_hbm [thread:$0]  %s129, 256, %s131, [#allocation9], 128, 128, 8
    $region29: #{tpu_custom_call.1} parent=1 // pred_fallthru
      _
    // Predicated region
    $region30: #{tpu_custom_call.1} parent=1 // pred_check
      _
    $region31: #{tpu_custom_call.1} parent=1 // pred_check_branch
      %138 = sbr.rel (0) target = $region33
    $region32: #{tpu_custom_call.1} parent=1 // pred_region
      %140 = vsyncadd [#allocation9], 0
      %s141 = sshll.u32 [#allocation10], 4
      %s142 = int_to_ptr.vmem [resolvable:$true] %s141
      %s143 = sshll.u32 %s5, 4
      %s144 = int_to_ptr.hbm [resolvable:$true] %s143
      %149 = dma.vmem_to_hbm [thread:$0]  %s142, 256, %s144, [#allocation9], 128, 128, 8
    $region33: #{tpu_custom_call.1} parent=1 // pred_fallthru
      _
    // Predicated region
    $region34: #{tpu_custom_call.1} parent=1 // pred_check
      _
    $region35: #{tpu_custom_call.1} parent=1 // pred_check_branch
      %151 = sbr.rel (0) target = $region37
    $region36: #{tpu_custom_call.1} parent=1 // pred_region
      %153 = dma.done [#allocation4], 256
    $region37: #{tpu_custom_call.1} parent=1 // pred_fallthru
      _
    // Predicated region
    $region38: #{tpu_custom_call.1} parent=1 // pred_check
      _
    $region39: #{tpu_custom_call.1} parent=1 // pred_check_branch
      %155 = sbr.rel (0) target = $region41
    $region40: #{tpu_custom_call.1} parent=1 // pred_region
      %157 = dma.done [#allocation9], 256
    $region41: #{tpu_custom_call.1} parent=1 // pred_fallthru
      _
    // Predicated region
    $region42: #{tpu_custom_call.1} parent=1 // pred_check
      _
    $region43: #{tpu_custom_call.1} parent=1 // pred_check_branch
      %159 = sbr.rel (0) target = $region45
    $region44: #{tpu_custom_call.1} parent=1 // pred_region
      %161 = dma.done [#allocation9], 256
    $region45: #{tpu_custom_call.1} parent=1 // pred_fallthru
      _
    %162 = vsyncpa [#allocation3], 1
    %163 = vsyncpa [#allocation6], 1
    %164 = vsyncpa [#allocation4], 1
    %165 = vsyncpa [#allocation9], 1

</llo_original>
